<compile_context>
chip_gen: v7x
topology: tpu7x:2x2x1
jax: 0.10.0
libtpu: 0.0.40
codegen_flags: <defaults>
</compile_context>

<pallas_src>
import functools

import jax
import jax.numpy as jnp
from jax.experimental import pallas as pl
from jax.experimental.pallas import tpu as pltpu


# ----------------------------------------------------------------------------
# Kernels
# ----------------------------------------------------------------------------

def add_pos_kernel(x_ref, pos_ref, out_ref):
    # x_ref / out_ref: (S, D) (leading batch dim squeezed), pos_ref: (S, D)
    out_ref[...] = x_ref[...] + pos_ref[...]


def _gelu_exact(x):
    # TODO(synk): lax.erf lowering is not guaranteed in Mosaic; exact-GELU uses the
    # Abramowitz & Stegun 7.1.26 erf polynomial (|err| <= 1.5e-7, below f32 matmul noise).
    a1, a2, a3, a4, a5 = 0.254829592, -0.284496736, 1.421413741, -1.453152027, 1.061405429
    p = 0.3275911
    z = x * 0.7071067811865476  # x / sqrt(2)
    az = jnp.abs(z)
    t = 1.0 / (1.0 + p * az)
    poly = ((((a5 * t + a4) * t + a3) * t + a2) * t + a1) * t
    erf_abs = 1.0 - poly * jnp.exp(-az * az)
    erf = jnp.where(z >= 0.0, erf_abs, -erf_abs)
    return 0.5 * x * (1.0 + erf)


def transformer_layer_kernel(x_ref,
                             ln1w_ref, ln1b_ref,
                             wq_ref, bq_ref, wk_ref, bk_ref, wv_ref, bv_ref,
                             wo_ref, bo_ref,
                             ln2w_ref, ln2b_ref,
                             w1_ref, b1_ref, w2_ref, b2_ref,
                             out_ref, k_scratch, v_scratch,
                             *, num_heads, eps, tq, n_kt, causal):
    q_idx = pl.program_id(1)
    d = x_ref.shape[-1]
    hd = d // num_heads
    tk = tq                       # KV tile size == query tile size (diagonal-tile logic)
    scale = 1.0 / (hd ** 0.5)

    def layer_norm(v, w, b):
        mu = jnp.mean(v, axis=-1, keepdims=True)
        c = v - mu
        var = jnp.mean(c * c, axis=-1, keepdims=True)
        return c * jax.lax.rsqrt(var + eps) * w + b

    ln1w = ln1w_ref[...]
    ln1b = ln1b_ref[...]

    # ---- K/V projection: computed once per batch element, cached in VMEM scratch ----
    @pl.when(q_idx == 0)
    def _():
        xn_f = layer_norm(x_ref[...], ln1w, ln1b)                       # (S, D)
        k_scratch[...] = (jnp.dot(xn_f, wk_ref[...],
                                  preferred_element_type=jnp.float32) + bk_ref[...])
        v_scratch[...] = (jnp.dot(xn_f, wv_ref[...],
                                  preferred_element_type=jnp.float32) + bv_ref[...])

    # ---- query tile: sliced from the resident full-sequence block ----
    row0 = pl.multiple_of(q_idx * tq, tq)
    xt = x_ref[pl.ds(row0, tq), :]                                      # (TQ, D)
    xn_t = layer_norm(xt, ln1w, ln1b)
    q = jnp.dot(xn_t, wq_ref[...], preferred_element_type=jnp.float32) + bq_ref[...]

    # KV tiles to visit: causal attention only needs tiles up to (and incl.) the diagonal.
    n_kv = (q_idx + 1) if causal else n_kt
    row_ids = q_idx * tq + jax.lax.broadcasted_iota(jnp.int32, (tq, tk), 0)

    def head_out(h):
        qh = q[:, h * hd:(h + 1) * hd]                                  # (TQ, hd)

        def body(j, carry):
            m, l, acc = carry
            koff = pl.multiple_of(j * tk, tk)
            kh = k_scratch[pl.ds(koff, tk), h * hd:(h + 1) * hd]        # (TK, hd)
            vh = v_scratch[pl.ds(koff, tk), h * hd:(h + 1) * hd]        # (TK, hd)
            sc = jax.lax.dot_general(qh, kh, (((1,), (1,)), ((), ())),
                                     preferred_element_type=jnp.float32) * scale
            if causal:
                # Mask generated in-kernel (no HBM mask traffic); cheap VPU filler.
                col_ids = j * tk + jax.lax.broadcasted_iota(jnp.int32, (tq, tk), 1)
                sc = jnp.where(col_ids <= row_ids, sc, -1e30)
            m_new = jnp.maximum(m, jnp.max(sc, axis=-1, keepdims=True))
            alpha = jnp.exp(m - m_new)
            p = jnp.exp(sc - m_new)
            l_new = alpha * l + jnp.sum(p, axis=-1, keepdims=True)
            acc_new = alpha * acc + jnp.dot(p, vh, preferred_element_type=jnp.float32)
            return m_new, l_new, acc_new

        m0 = jnp.full((tq, 1), -1e30, dtype=jnp.float32)
        l0 = jnp.zeros((tq, 1), dtype=jnp.float32)
        a0 = jnp.zeros((tq, hd), dtype=jnp.float32)
        m, l, acc = jax.lax.fori_loop(0, n_kv, body, (m0, l0, a0))
        # Deferred softmax normalization: divide the (TQ, hd) result, not the (TQ, TK) probs.
        return acc / l

    # Concatenate all heads and do ONE full-contraction out-projection matmul.
    o_cat = jnp.concatenate([head_out(h) for h in range(num_heads)], axis=-1)   # (TQ, D)
    attn = jnp.dot(o_cat, wo_ref[...], preferred_element_type=jnp.float32) + bo_ref[...]
    y = xt + attn                                                       # residual

    # ---- feed-forward block (pre-LN) ----
    yn = layer_norm(y, ln2w_ref[...], ln2b_ref[...])
    h1 = _gelu_exact(jnp.dot(yn, w1_ref[...],
                             preferred_element_type=jnp.float32) + b1_ref[...])
    ff = jnp.dot(h1, w2_ref[...], preferred_element_type=jnp.float32) + b2_ref[...]

    out_ref[...] = y + ff


# ----------------------------------------------------------------------------
# Wrapper
# ----------------------------------------------------------------------------

def transformer_sequence_encoder_forward(x, pos, layers, *, num_heads, causal=True, eps=1e-5):
    b, s, d = x.shape
    assert d % num_heads == 0

    # Query/KV tile: whole (small) sequences stay a single tile; otherwise 256-row tiles
    # (matches v6e/v7x 2x256x256 MXU) falling back to 128 (v5e-friendly).
    if s <= 128:
        tq = s
    elif s % 256 == 0:
        tq = 256
    else:
        tq = 128
    assert s % tq == 0
    n_qt = s // tq

    # --- positional embedding add (batch-parallel) ---------------------------
    x = pl.pallas_call(
        add_pos_kernel,
        out_shape=jax.ShapeDtypeStruct((b, s, d), jnp.float32),
        grid=(b,),
        in_specs=[pl.BlockSpec((None, s, d), lambda i: (i, 0, 0)),
                  pl.BlockSpec((s, d), lambda i: (0, 0))],
        out_specs=pl.BlockSpec((None, s, d), lambda i: (i, 0, 0)),
        compiler_params=pltpu.CompilerParams(dimension_semantics=("parallel",)),
    )(x, pos)

    def const_spec(shape):
        return pl.BlockSpec(shape, lambda i, q: (0,) * len(shape))

    kernel = functools.partial(transformer_layer_kernel,
                               num_heads=num_heads, eps=eps, tq=tq,
                               n_kt=n_qt, causal=causal)

    for p in layers:
        weight_args = (p['ln1_w'], p['ln1_b'],
                       p['wq'], p['bq'], p['wk'], p['bk'], p['wv'], p['bv'],
                       p['wo_t'], p['bo'],
                       p['ln2_w'], p['ln2_b'],
                       p['w1_t'], p['b1'], p['w2_t'], p['b2'])
        x = pl.pallas_call(
            kernel,
            out_shape=jax.ShapeDtypeStruct((b, s, d), jnp.float32),
            grid=(b, n_qt),
            in_specs=[pl.BlockSpec((None, s, d), lambda i, q: (i, 0, 0))]   # resident full seq
                     + [const_spec(w.shape) for w in weight_args],          # resident weights
            out_specs=pl.BlockSpec((None, tq, d), lambda i, q: (i, q, 0)),  # lane-dense tile
            scratch_shapes=[pltpu.VMEM((s, d), jnp.float32),                # K cache (per batch)
                            pltpu.VMEM((s, d), jnp.float32)],               # V cache (per batch)
            compiler_params=pltpu.CompilerParams(
                dimension_semantics=("parallel", "arbitrary"),
                vmem_limit_bytes=64 * 1024 * 1024),
        )(x, *weight_args)

    return x


# ----------------------------------------------------------------------------
# Pure-JAX reference (mirrors the PyTorch module semantics; exact erf-GELU)
# ----------------------------------------------------------------------------

def reference_forward(x, pos, layers, *, num_heads, causal=True, eps=1e-5):
    def layer_norm(v, w, b):
        mu = jnp.mean(v, axis=-1, keepdims=True)
        var = jnp.mean((v - mu) ** 2, axis=-1, keepdims=True)
        return (v - mu) / jnp.sqrt(var + eps) * w + b

    x = x + pos[None]
    bsz, s, d = x.shape
    hd = d // num_heads
    if causal:
        keep = jnp.tril(jnp.ones((s, s), dtype=jnp.bool_))
        mask = jnp.where(keep, 0.0, -1e30).astype(jnp.float32)
    else:
        mask = jnp.zeros((s, s), dtype=jnp.float32)
    for p in layers:
        xn = layer_norm(x, p['ln1_w'], p['ln1_b'])
        q = xn @ p['wq'] + p['bq']
        k = xn @ p['wk'] + p['bk']
        v = xn @ p['wv'] + p['bv']
        q = q.reshape(bsz, s, num_heads, hd).transpose(0, 2, 1, 3)
        k = k.reshape(bsz, s, num_heads, hd).transpose(0, 2, 1, 3)
        v = v.reshape(bsz, s, num_heads, hd).transpose(0, 2, 1, 3)
        scores = jnp.einsum('bhqd,bhkd->bhqk', q, k) / (hd ** 0.5) + mask
        attn = jax.nn.softmax(scores, axis=-1)
        o = jnp.einsum('bhqk,bhkd->bhqd', attn, v)
        o = o.transpose(0, 2, 1, 3).reshape(bsz, s, d)
        x = x + o @ p['wo_t'] + p['bo']
        yn = layer_norm(x, p['ln2_w'], p['ln2_b'])
        h1 = jax.nn.gelu(yn @ p['w1_t'] + p['b1'], approximate=False)
        x = x + h1 @ p['w2_t'] + p['b2']
    return x


# ----------------------------------------------------------------------------
# Demo / self-test
# ----------------------------------------------------------------------------

if __name__ == "__main__":
    B = 2           # batch
    SEQ = 8         # seq_len
    DIM = 32        # d_model
    HEADS = 4       # num_heads (head_dim = 8)
    LAYERS = 2      # num_layers
    DFF = DIM       # dim_feedforward = dim in the module
    BIDIR = False   # causal attention (module default)

    key = jax.random.PRNGKey(0)

    def nrm(k, shape, scale=0.1):
        return jax.random.normal(k, shape, dtype=jnp.float32) * scale

    key, kx, kpos = jax.random.split(key, 3)
    x = jax.random.normal(kx, (B, SEQ, DIM), dtype=jnp.float32)
    pos = nrm(kpos, (SEQ, DIM), 0.02)                  # positional_embeddings.weight

    layers = []
    for _ in range(LAYERS):
        key, *ks = jax.random.split(key, 17)
        ks = iter(ks)
        layers.append(dict(
            ln1_w=1.0 + nrm(next(ks), (1, DIM), 0.05),
            ln1_b=nrm(next(ks), (1, DIM), 0.05),
            wq=nrm(next(ks), (DIM, DIM)), bq=nrm(next(ks), (1, DIM)),
            wk=nrm(next(ks), (DIM, DIM)), bk=nrm(next(ks), (1, DIM)),
            wv=nrm(next(ks), (DIM, DIM)), bv=nrm(next(ks), (1, DIM)),
            wo_t=nrm(next(ks), (DIM, DIM)), bo=nrm(next(ks), (1, DIM)),
            ln2_w=1.0 + nrm(next(ks), (1, DIM), 0.05),
            ln2_b=nrm(next(ks), (1, DIM), 0.05),
            w1_t=nrm(next(ks), (DIM, DFF)), b1=nrm(next(ks), (1, DFF)),
            w2_t=nrm(next(ks), (DFF, DIM)), b2=nrm(next(ks), (1, DIM)),
        ))

    out = transformer_sequence_encoder_forward(x, pos, layers,
                                               num_heads=HEADS, causal=not BIDIR)
    out = jax.block_until_ready(out)

    ref = reference_forward(x, pos, layers, num_heads=HEADS, causal=not BIDIR)

    assert out.shape == (B, SEQ, DIM), out.shape
    max_err = float(jnp.max(jnp.abs(out - ref)))
    assert jnp.allclose(out, ref, rtol=2e-4, atol=2e-4), max_err

    print("KERNEL_OK")
</pallas_src>

<mosaic_0001>
module attributes {stable_mosaic.version = 11 : i64} {
  func.func @add_pos_kernel(%arg0: i32, %arg1: memref<1x8x32xf32, #tpu.memory_space<vmem>>, %arg2: memref<8x32xf32, #tpu.memory_space<vmem>>, %arg3: memref<1x8x32xf32, #tpu.memory_space<vmem>>) attributes {dimension_semantics = [#tpu.dimension_semantics<parallel>], iteration_bounds = array<i64: 2>, scalar_prefetch = 0 : i64, scratch_operands = 0 : i64, tpu.core_type = #tpu.core_type<tc>, window_params = [{transform_indices = @transform_0, window_bounds = array<i64: 1, 8, 32>}, {pipeline_mode = #tpu.pipeline_mode<synchronous>, transform_indices = @transform_1, window_bounds = array<i64: 8, 32>}, {transform_indices = @transform_2, window_bounds = array<i64: 1, 8, 32>}]} {
    %c0 = arith.constant 0 : index
    %c0_0 = arith.constant 0 : index
    %c0_1 = arith.constant 0 : index
    %0 = vector.load %arg1[%c0, %c0_0, %c0_1] : memref<1x8x32xf32, #tpu.memory_space<vmem>>, vector<1x8x32xf32>
    %1 = vector.shape_cast %0 : vector<1x8x32xf32> to vector<8x32xf32>
    %c0_2 = arith.constant 0 : index
    %c0_3 = arith.constant 0 : index
    %2 = vector.load %arg2[%c0_2, %c0_3] : memref<8x32xf32, #tpu.memory_space<vmem>>, vector<8x32xf32>
    %3 = arith.addf %1, %2 : vector<8x32xf32>
    %c0_4 = arith.constant 0 : index
    %c0_5 = arith.constant 0 : index
    %c0_6 = arith.constant 0 : index
    %4 = vector.load %arg3[%c0_4, %c0_5, %c0_6] : memref<1x8x32xf32, #tpu.memory_space<vmem>>, vector<1x8x32xf32>
    %5 = vector.shape_cast %4 : vector<1x8x32xf32> to vector<8x32xf32>
    %6 = vector.shape_cast %3 : vector<8x32xf32> to vector<1x8x32xf32>
    tpu.vector_store %arg3[%c0_4, %c0_5, %c0_6], %6 {strides = array<i32>} : memref<1x8x32xf32, #tpu.memory_space<vmem>>, vector<1x8x32xf32>,
    return
  }
  func.func @transform_0(%arg0: i32) -> (i32, i32, i32) {
    %c0_i32 = arith.constant 0 : i32
    %c0_i32_0 = arith.constant 0 : i32
    %c0_i32_1 = arith.constant 0 : i32
    return %arg0, %c0_i32, %c0_i32_0 : i32, i32, i32
  }
  func.func @transform_1(%arg0: i32) -> (i32, i32) {
    %c0_i32 = arith.constant 0 : i32
    %c0_i32_0 = arith.constant 0 : i32
    %c0_i32_1 = arith.constant 0 : i32
    return %c0_i32, %c0_i32_0 : i32, i32
  }
  func.func @transform_2(%arg0: i32) -> (i32, i32, i32) {
    %c0_i32 = arith.constant 0 : i32
    %c0_i32_0 = arith.constant 0 : i32
    %c0_i32_1 = arith.constant 0 : i32
    return %arg0, %c0_i32, %c0_i32_0 : i32, i32, i32
  }
}

</mosaic_0001>

<llo_original>
// kernel: tpu_custom_call.1
$region0: #{tpu_custom_call.1}
  #allocation0 [shape = 'u32[]', space=smem, size = 0x4, offset = 0x4, fixed_abs, tag = 'smem constant byte address 0x4 - core index']
  #allocation1 [shape = 'u32[144,128]{1,0:T(1,128)}', space=vmem, size = 0x12000, scoped, tag = 'internal scratch']
  %s0 = inlined_call_operand.hbm [shape: f32[2,8,32], index: 0, kind: input, shape index: {}]
  %s1 = inlined_call_operand.hbm [shape: f32[8,32], index: 1, kind: input, shape index: {}]
  %s2 = inlined_call_operand.hbm [shape: f32[2,8,32], index: 2, kind: output, shape index: {}]
  %s3 = sld [smem:[#allocation0]]
  $region49: #{tpu_custom_call.1} parent=0
    _
  %s5 = ssub.s32 1, %s3
  %s6 = scalar_select 0, %s5, %s3
  $region1: #{tpu_custom_call.1} parent=0
    #allocation2 [shape = 'u8[8192]{0}', space=vmem, size = 0x2000, scoped, tag = 'input window, operand 0']
    #allocation3 [shape = 's32[2]{0}', space=sflag, size = 0x8, scoped, tag = 'scoped memory for tpu_custom_call.1']
    #allocation4 [shape = 's32[2]{0}', space=sflag, size = 0x8, scoped, tag = 'scoped memory for tpu_custom_call.1']
    #allocation5 [shape = 'u8[4096]{0}', space=vmem, size = 0x1000, scoped, tag = 'input window, operand 1, single buffered']
    #allocation6 [shape = 's32[1]{0}', space=sflag, size = 0x4, scoped, tag = 'scoped memory for tpu_custom_call.1']
    #allocation7 [shape = 'u8[8192]{0}', space=vmem, size = 0x2000, scoped, tag = 'output window, operand 0']
    %7 = vsyncpa [#allocation3], 0
    %s8 = scalar_lea.sflag [#allocation3], 1
    %9 = vsyncpa %s8, 0
    %10 = vsyncpa [#allocation6], 0
    %11 = vsyncpa [#allocation4], 0
    %s12 = scalar_lea.sflag [#allocation4], 1
    %13 = vsyncpa %s12, 0
    loop: start=0, step=1, limit=4
    $region2: #{tpu_custom_call.1} parent=1 // loop_pre_header
      _
    $region3: #{tpu_custom_call.1} parent=1 // loop_header
      %s15 = sphi 0, %s19
      %p16 = scmp.ge.s32.totalorder %s15, 4
      %s25 = sphi 0, %s27
      %s28 = sphi 0, %s25
      %s29 = sphi 0, %s28
      %s45 = sphi 0, %s29
      %s49 = sphi 0, %s49
      %s51 = sphi 0, %s49
      %s52 = sphi 0, %s51
      %s66 = sphi 0, %s52
      %s72 = sphi 0, %s74
      %s75 = sphi 0, %s72
      %s76 = sphi 0, %s75
      %s92 = sphi 0, %s76
    $region4: #{tpu_custom_call.1} parent=1 // loop_header_branch
      %18 = sbr.rel (%p16) target = $region8
    $region5: #{tpu_custom_call.1} parent=1 // loop_body
      %s20 = ssub.s32 %s15, 1
      %s21 = ssub.s32 %s15, 2
      %s22 = sadd.s32 %s15, 1
      %s23 = ssub.s32 %s15, %s22
      %p24 = scmp.eq.s32.totalorder %s23, 0
      %s26 = sadd.s32 %s25, 1
      %s27 = scalar_select %p24, %s25, %s26
      %p30 = pneg %p24
      %p31 = scmp.eq.s32.totalorder %s15, 1
      %p32 = por %p30, %p31
      %p33 = scmp.ne.s32.totalorder %s25, %s28
      %p34 = scmp.eq.s32.totalorder %s15, 0
      %p35 = por %p33, %p34
      %p36 = scmp.ne.s32.totalorder %s25, %s28
      %p37 = scmp.eq.s32.totalorder %s20, 1
      %p38 = por %p36, %p37
      %p39 = scmp.ne.s32.totalorder %s28, %s29
      %p40 = scmp.eq.s32.totalorder %s20, 0
      %p41 = por %p39, %p40
      %p42 = scmp.ne.s32.totalorder %s28, %s29
      %p43 = scmp.eq.s32.totalorder %s21, 1
      %p44 = por %p42, %p43
      %p46 = scmp.ne.s32.totalorder %s29, %s45
      %p47 = scmp.eq.s32.totalorder %s21, 0
      %p48 = por %p46, %p47
      %s50 = sadd.s32 %s49, 1
      %p53 = scmp.eq.s32.totalorder %s15, 1
      %p54 = scmp.ne.s32.totalorder %s49, %s51
      %p55 = scmp.eq.s32.totalorder %s15, 0
      %p56 = por %p54, %p55
      %p57 = scmp.ne.s32.totalorder %s49, %s51
      %p58 = scmp.eq.s32.totalorder %s20, 1
      %p59 = por %p57, %p58
      %p60 = scmp.ne.s32.totalorder %s51, %s52
      %p61 = scmp.eq.s32.totalorder %s20, 0
      %p62 = por %p60, %p61
      %p63 = scmp.ne.s32.totalorder %s51, %s52
      %p64 = scmp.eq.s32.totalorder %s21, 1
      %p65 = por %p63, %p64
      %p67 = scmp.ne.s32.totalorder %s52, %s66
      %p68 = scmp.eq.s32.totalorder %s21, 0
      %p69 = por %p67, %p68
      %s70 = ssub.s32 %s15, %s22
      %p71 = scmp.eq.s32.totalorder %s70, 0
      %s73 = sadd.s32 %s72, 1
      %s74 = scalar_select %p71, %s72, %s73
      %p77 = pneg %p71
      %p78 = scmp.eq.s32.totalorder %s15, 1
      %p79 = por %p77, %p78
      %p80 = scmp.ne.s32.totalorder %s72, %s75
      %p81 = scmp.eq.s32.totalorder %s15, 0
      %p82 = por %p80, %p81
      %p83 = scmp.ne.s32.totalorder %s72, %s75
      %p84 = scmp.eq.s32.totalorder %s20, 1
      %p85 = por %p83, %p84
      %p86 = scmp.ne.s32.totalorder %s75, %s76
      %p87 = scmp.eq.s32.totalorder %s20, 0
      %p88 = por %p86, %p87
      %p89 = scmp.ne.s32.totalorder %s75, %s76
      %p90 = scmp.eq.s32.totalorder %s21, 1
      %p91 = por %p89, %p90
      %p93 = scmp.ne.s32.totalorder %s76, %s92
      %p94 = scmp.eq.s32.totalorder %s21, 0
      %p95 = por %p93, %p94
      %p96 = scmp.le.s32.totalorder 1, %s15
      %p97 = scmp.lt.s32.totalorder %s15, 3
      %p98 = pnand %p96, %p97
      %p99 = pneg %p98
      // Predicated region
      $region9: #{tpu_custom_call.1} parent=5 // pred_check
        _
      $region10: #{tpu_custom_call.1} parent=5 // pred_check_branch
        %101 = sbr.rel (%p98) target = $region12
      $region11: #{tpu_custom_call.1} parent=5 // pred_region
        %s102 = ssub.s32 %s15, 1
        // Predicated region
        $region13: #{tpu_custom_call.1} parent=11 // pred_check
          %p103 = pneg %p62
        $region14: #{tpu_custom_call.1} parent=11 // pred_check_branch
          %105 = sbr.rel (%p103) target = $region16
        $region15: #{tpu_custom_call.1} parent=11 // pred_region
          %s107 = ssub.s32 128, 128
          %108 = vsyncadd [#allocation6], %s107
          %s110 = sshll.u32 [#allocation5], 4
          %s111 = int_to_ptr.vmem [resolvable:$true] %s110
          %113 = dma.hbm_to_vmem [thread:$0]  %s1, 128, %s111, [#allocation6]
        $region16: #{tpu_custom_call.1} parent=11 // pred_fallthru
          _
      $region12: #{tpu_custom_call.1} parent=5 // pred_fallthru
        _
      %p114 = scmp.lt.s32.totalorder %s15, 2
      // Predicated region
      $region17: #{tpu_custom_call.1} parent=5 // pred_check
        %p115 = pneg %p114
      $region18: #{tpu_custom_call.1} parent=5 // pred_check_branch
        %117 = sbr.rel (%p115) target = $region20
      $region19: #{tpu_custom_call.1} parent=5 // pred_region
        // Predicated region
        $region21: #{tpu_custom_call.1} parent=19 // pred_check
          %p118 = pneg %p35
        $region22: #{tpu_custom_call.1} parent=19 // pred_check_branch
          %120 = sbr.rel (%p118) target = $region24
        $region23: #{tpu_custom_call.1} parent=19 // pred_region
          %s121 = sand.u32 %s25, 1
          %s122 = scalar_lea.sflag [#allocation3], %s121
          %s123 = sand.u32 %s25, 1
          %s124 = smul.addr %s123, 8
          %s125 = scalar_lea.vmem [#allocation2], %s124
          %s127 = ssub.s32 128, 128
          %128 = vsyncadd %s122, %s127
          %s129 = smul.addr %s15, 128
          %s130 = scalar_lea.hbm %s0, %s129
          %s132 = sshll.u32 %s125, 4
          %s133 = int_to_ptr.vmem [resolvable:$true] %s132
          %135 = dma.hbm_to_vmem [thread:$0]  %s130, 128, %s133, %s122
        $region24: #{tpu_custom_call.1} parent=19 // pred_fallthru
          _
      $region20: #{tpu_custom_call.1} parent=5 // pred_fallthru
        _
      %p136 = scmp.le.s32.totalorder 1, %s15
      %p137 = scmp.lt.s32.totalorder %s15, 3
      %p138 = pnand %p136, %p137
      %p139 = pneg %p138
      // Predicated region
      $region25: #{tpu_custom_call.1} parent=5 // pred_check
        _
      $region26: #{tpu_custom_call.1} parent=5 // pred_check_branch
        %141 = sbr.rel (%p138) target = $region28
      $region27: #{tpu_custom_call.1} parent=5 // pred_region
        %s142 = ssub.s32 %s15, 1
        %s143 = sand.u32 %s28, 1
        %s144 = scalar_lea.sflag [#allocation3], %s143
        %s145 = sand.u32 %s28, 1
        %s146 = smul.addr %s145, 8
        %s147 = scalar_lea.vmem [#allocation2], %s146
        // Predicated region
        $region29: #{tpu_custom_call.1} parent=27 // pred_check
          %p148 = pneg %p41
        $region30: #{tpu_custom_call.1} parent=27 // pred_check_branch
          %150 = sbr.rel (%p148) target = $region32
        $region31: #{tpu_custom_call.1} parent=27 // pred_region
          %151 = dma.done %s144, 128
        $region32: #{tpu_custom_call.1} parent=27 // pred_fallthru
          _
        // Predicated region
        $region33: #{tpu_custom_call.1} parent=27 // pred_check
          %p152 = pneg %p62
        $region34: #{tpu_custom_call.1} parent=27 // pred_check_branch
          %154 = sbr.rel (%p152) target = $region36
        $region35: #{tpu_custom_call.1} parent=27 // pred_region
          %155 = dma.done [#allocation6], 128
        $region36: #{tpu_custom_call.1} parent=27 // pred_fallthru
          _
        %s156 = sand.u32 %s28, 1
        %s157 = scalar_lea.sflag [#allocation3], %s156
        %s158 = sand.u32 %s28, 1
        %s159 = smul.addr %s158, 8
        %s160 = scalar_lea.vmem [#allocation2], %s159
        %p161 = pneg %p41
        %p162 = pneg %p38
        %p163 = pneg %p62
        %p164 = pneg %p59
        %p165 = pneg %p88
        %p166 = pneg %p85
        %s167 = sand.u32 %s75, 1
        %s168 = scalar_lea.sflag [#allocation4], %s167
        %s169 = sand.u32 %s75, 1
        %s170 = smul.addr %s169, 8
        %s171 = scalar_lea.vmem [#allocation7], %s170
        %v172 = vld [vmem:[%s147] sm:$0xff]
        %v173 = vld [vmem:[#allocation5] sm:$0xff]
        %v174 = vadd.f32 %v172, %v173
        %vm175 = vcmask 261120
        %176 = vst.msk [vmem:[%s171] sm:$0xff] %vm175, %v174
        %s177 = sand.u32 %s75, 1
        %s178 = scalar_lea.sflag [#allocation4], %s177
        %s179 = sand.u32 %s75, 1
        %s180 = smul.addr %s179, 8
        %s181 = scalar_lea.vmem [#allocation7], %s180
        // Predicated region
        $region37: #{tpu_custom_call.1} parent=27 // pred_check
          %p182 = pneg %p85
        $region38: #{tpu_custom_call.1} parent=27 // pred_check_branch
          %184 = sbr.rel (%p182) target = $region40
        $region39: #{tpu_custom_call.1} parent=27 // pred_region
          %s186 = ssub.s32 128, 128
          %187 = vsyncadd %s178, %s186
          %s188 = smul.addr %s20, 128
          %s189 = scalar_lea.hbm %s2, %s188
          %s191 = sshll.u32 %s181, 4
          %s192 = int_to_ptr.vmem [resolvable:$true] %s191
          %194 = dma.vmem_to_hbm [thread:$0]  %s192, 128, %s189, %s178
        $region40: #{tpu_custom_call.1} parent=27 // pred_fallthru
          _
      $region28: #{tpu_custom_call.1} parent=5 // pred_fallthru
        _
      %p195 = scmp.le.s32.totalorder 2, %s15
      // Predicated region
      $region41: #{tpu_custom_call.1} parent=5 // pred_check
        %p196 = pneg %p195
      $region42: #{tpu_custom_call.1} parent=5 // pred_check_branch
        %198 = sbr.rel (%p196) target = $region44
      $region43: #{tpu_custom_call.1} parent=5 // pred_region
        %s199 = ssub.s32 %s15, 2
        // Predicated region
        $region45: #{tpu_custom_call.1} parent=43 // pred_check
          %p200 = pneg %p91
        $region46: #{tpu_custom_call.1} parent=43 // pred_check_branch
          %202 = sbr.rel (%p200) target = $region48
        $region47: #{tpu_custom_call.1} parent=43 // pred_region
          %s203 = sand.u32 %s76, 1
          %s204 = scalar_lea.sflag [#allocation4], %s203
          %s205 = sand.u32 %s76, 1
          %s206 = smul.addr %s205, 8
          %s207 = scalar_lea.vmem [#allocation7], %s206
          %208 = dma.done %s204, 128
        $region48: #{tpu_custom_call.1} parent=43 // pred_fallthru
          _
      $region44: #{tpu_custom_call.1} parent=5 // pred_fallthru
        _
    $region6: #{tpu_custom_call.1} parent=1 // loop_footer
      %s19 = sadd.s32 1, %s15
    $region7: #{tpu_custom_call.1} parent=1 // loop_footer_branch
      %14 = sbr.rel target = $region3
    $region8: #{tpu_custom_call.1} parent=1 // loop_exit
      _
    %209 = vsyncpa [#allocation3], 1
    %s210 = scalar_lea.sflag [#allocation3], 1
    %211 = vsyncpa %s210, 1
    %212 = vsyncpa [#allocation6], 1
    %213 = vsyncpa [#allocation4], 1
    %s214 = scalar_lea.sflag [#allocation4], 1
    %215 = vsyncpa %s214, 1

</llo_original>
